<compile_context>
chip_gen: v6e
topology: v6e:2x2x1
jax: 0.10.0
libtpu: 0.0.40
codegen_flags: <defaults>
</compile_context>

<pallas_src>
import functools

import jax
import jax.numpy as jnp
from jax.experimental import pallas as pl
from jax.experimental.pallas import tpu as pltpu

_LANE = 128
_MAX_L = 2048  # keep lanes moderate so R is tall and row tiles stay aligned


def _round_up(n, m):
    return ((n + m - 1) // m) * m


def _largest_aligned_divisor(n, align, cap):
    """Largest d such that d % align == 0, d divides n, d <= cap. None if none."""
    best = None
    d = align
    limit = min(n, cap)
    while d <= limit:
        if n % d == 0:
            best = d
        d += align
    return best


def _chip_budget():
    """(target bytes per input block, vmem_limit_bytes) gated on physical VMEM."""
    try:
        vmem_cap = pltpu.get_tpu_info().vmem_capacity_bytes
    except Exception:  # unknown chip / no device info: be conservative (v7x-like)
        vmem_cap = 64 * 1024 * 1024
    if vmem_cap >= 100 * 1024 * 1024:  # v5e / v6e: 128 MiB physical VMEM
        return 8 * 1024 * 1024, 48 * 1024 * 1024
    # v7x (64 MiB physical): 4 MiB blocks -> 2 inputs x 2 bufs = 16 MiB + headroom
    return 4 * 1024 * 1024, 32 * 1024 * 1024


def _plan_tiling(spatial, itemsize, target_block_bytes):
    """Return (padded_spatial, L, R, tile_r). padded_spatial == spatial means no copy."""
    row_align = max(8, 32 // itemsize)  # 8 for f32, 16 for bf16, 32 for int8/fp8
    target_elems = max(row_align * _LANE, target_block_bytes // itemsize)

    if spatial % _LANE == 0:
        L = _largest_aligned_divisor(spatial, _LANE, _MAX_L)  # exists (>= 128)
        R = spatial // L
        target_r = max(row_align, target_elems // L)
        if R <= target_r:
            return spatial, L, R, R
        tile_r = _largest_aligned_divisor(R, row_align, target_r)
        if tile_r is not None:
            return spatial, L, R, tile_r

    # Degenerate shapes: pad the flattened slice with zeros (zeros in both x and
    # y contribute 0 to the squared-difference sum, so the result is unchanged).
    L = 1024
    s = _round_up(spatial, L)
    R = s // L
    target_r = max(row_align, target_elems // L)
    if R <= target_r:
        return s, L, R, R
    s = _round_up(spatial, L * row_align)
    R = s // L  # multiple of row_align -> an aligned tile_r always exists
    tile_r = _largest_aligned_divisor(R, row_align, target_r)
    return s, L, R, tile_r


def _weighted_mse_partial_kernel(x_ref, y_ref, acc_ref, *, full_groups, rem, acc_rows):
    b = pl.program_id(1)
    r = pl.program_id(2)

    # First (b, r) step for this channel: zero the resident accumulator block.
    @pl.when((b == 0) & (r == 0))
    def _init():
        acc_ref[...] = jnp.zeros_like(acc_ref)

    def add_chunk(start, rows):
        xs = x_ref[0, pl.ds(start, rows), :].astype(jnp.float32)
        ys = y_ref[0, pl.ds(start, rows), :].astype(jnp.float32)
        d = xs - ys
        acc_ref[0, 0:rows, :] = acc_ref[0, 0:rows, :] + d * d

    if full_groups == 1:
        add_chunk(0, acc_rows)
    else:
        def body(g, carry):
            add_chunk(pl.multiple_of(g * acc_rows, acc_rows), acc_rows)
            return carry

        jax.lax.fori_loop(0, full_groups, body, 0, unroll=min(full_groups, 4))

    if rem:
        add_chunk(full_groups * acc_rows, rem)


def weighted_mse_loss(x, y, w_liver=1.0, w_tumor=1.0):
    """x, y: (B, C, *spatial) with C >= 2. Returns scalar f32 loss."""
    assert x.shape == y.shape and x.ndim >= 3 and x.shape[1] >= 2
    assert x.dtype == y.dtype
    B, C = x.shape[0], x.shape[1]
    spatial = 1
    for d in x.shape[2:]:
        spatial *= d
    itemsize = x.dtype.itemsize

    target_block_bytes, vmem_limit = _chip_budget()
    padded, L, R, tile_r = _plan_tiling(spatial, itemsize, target_block_bytes)
    nr = R // tile_r

    # Accumulator slab height / compute-chunk rows (<= 64 keeps chunk temps tiny
    # while keeping the fori_loop trip count low).
    acc_rows = min(64, tile_r)
    full_groups = tile_r // acc_rows
    rem = tile_r - full_groups * acc_rows

    if padded == spatial:
        # Free reshape of the contiguous NC* layout — no HBM copy. Channels
        # 2..C-1 are skipped purely via the BlockSpec index_map.
        c_stride = C
        x3 = x.reshape(B * C, R, L)
        y3 = y.reshape(B * C, R, L)
    else:
        # Degenerate spatial size: keep only the two used channels and zero-pad
        # their flattened slices (this path materializes a copy, but it is the
        # only robust way to keep blocks (8,128)-aligned and inside VMEM).
        c_stride = 2
        pad = padded - spatial
        x3 = jnp.pad(x[:, :2].reshape(B * 2, spatial), ((0, 0), (0, pad)))
        y3 = jnp.pad(y[:, :2].reshape(B * 2, spatial), ((0, 0), (0, pad)))
        x3 = x3.reshape(B * 2, R, L)
        y3 = y3.reshape(B * 2, R, L)

    kernel = functools.partial(
        _weighted_mse_partial_kernel,
        full_groups=full_groups,
        rem=rem,
        acc_rows=acc_rows,
    )

    # Channel selection happens here: row (b * c_stride + c) of the (.., R, L) view.
    in_spec = pl.BlockSpec((1, tile_r, L), lambda c, b, r: (b * c_stride + c, r, 0))
    # Per-channel accumulator block, resident across the (b, r) reduction axes.
    out_spec = pl.BlockSpec((1, acc_rows, L), lambda c, b, r: (c, 0, 0))

    read_elems = 2 * B * spatial  # elements actually consumed per input array
    cost = pl.CostEstimate(
        flops=3 * read_elems,  # sub + mul + add per element, both channels
        transcendentals=0,
        bytes_accessed=2 * read_elems * itemsize + 2 * acc_rows * L * 4,
    )

    partials = pl.pallas_call(
        kernel,
        out_shape=jax.ShapeDtypeStruct((2, acc_rows, L), jnp.float32),
        grid=(2, B, nr),
        in_specs=[in_spec, in_spec],
        out_specs=out_spec,
        compiler_params=pltpu.CompilerParams(
            # channel axis -> both TensorCores on v7x; reduction axes serial.
            dimension_semantics=("parallel", "arbitrary", "arbitrary"),
            vmem_limit_bytes=vmem_limit,
        ),
        cost_estimate=cost,
    )(x3, y3)

    inv_n = 1.0 / float(B * spatial)  # elements per channel slice (un-padded)
    liver = jnp.sum(partials[0])
    tumor = jnp.sum(partials[1])
    return (w_liver * liver + w_tumor * tumor) * inv_n


def weighted_mse_loss_ref(x, y, w_liver=1.0, w_tumor=1.0):
    """Pure-JAX reference matching the PyTorch module."""
    x = x.astype(jnp.float32)
    y = y.astype(jnp.float32)
    l0 = jnp.mean((x[:, 0:1, ...] - y[:, 0:1, ...]) ** 2)
    l1 = jnp.mean((x[:, 1:2, ...] - y[:, 1:2, ...]) ** 2)
    return w_liver * l0 + w_tumor * l1


if __name__ == "__main__":
    key = jax.random.PRNGKey(0)
    kx, ky = jax.random.split(key)
    # small NCHW shapes consistent with the module (needs C >= 2)
    x = jax.random.normal(kx, (2, 4, 16, 16), dtype=jnp.float32)
    y = jax.random.normal(ky, (2, 4, 16, 16), dtype=jnp.float32)

    w_liver, w_tumor = 1.0, 2.0  # deterministic, in-script "parameters"

    loss = weighted_mse_loss(x, y, w_liver=w_liver, w_tumor=w_tumor)
    jax.block_until_ready(loss)

    ref = weighted_mse_loss_ref(x, y, w_liver=w_liver, w_tumor=w_tumor)
    assert jnp.allclose(loss, ref, rtol=1e-5, atol=1e-5), (loss, ref)

    print("KERNEL_OK")
</pallas_src>

<mosaic_0001>
module attributes {stable_mosaic.version = 11 : i64} {
  func.func @_weighted_mse_partial_kernel(%arg0: i32, %arg1: i32, %arg2: i32, %arg3: memref<1x1x256xf32, #tpu.memory_space<vmem>>, %arg4: memref<1x1x256xf32, #tpu.memory_space<vmem>>, %arg5: memref<1x1x256xf32, #tpu.memory_space<vmem>>) attributes {dimension_semantics = [#tpu.dimension_semantics<parallel>, #tpu.dimension_semantics<arbitrary>, #tpu.dimension_semantics<arbitrary>], iteration_bounds = array<i64: 2, 2, 1>, scalar_prefetch = 0 : i64, scratch_operands = 0 : i64, tpu.core_type = #tpu.core_type<tc>, window_params = [{transform_indices = @transform_0, window_bounds = array<i64: 1, 1, 256>}, {transform_indices = @transform_1, window_bounds = array<i64: 1, 1, 256>}, {transform_indices = @transform_2, window_bounds = array<i64: 1, 1, 256>}]} {
    %c0_i32 = arith.constant 0 : i32
    %0 = arith.cmpi eq, %arg1, %c0_i32 : i32
    %c0_i32_0 = arith.constant 0 : i32
    %1 = arith.cmpi eq, %arg2, %c0_i32_0 : i32
    %2 = arith.andi %0, %1 : i1
    %3 = arith.extui %2 : i1 to i32
    %c0_i32_1 = arith.constant 0 : i32
    %4 = arith.cmpi ne, %3, %c0_i32_1 : i32
    scf.if %4 {
      %cst = arith.constant 0.000000e+00 : f32
      %17 = vector.broadcast %cst : f32 to vector<1x1x256xf32>
      %c0_13 = arith.constant 0 : index
      %c0_14 = arith.constant 0 : index
      %c0_15 = arith.constant 0 : index
      %18 = vector.load %arg5[%c0_13, %c0_14, %c0_15] : memref<1x1x256xf32, #tpu.memory_space<vmem>>, vector<1x1x256xf32>
      tpu.vector_store %arg5[%c0_13, %c0_14, %c0_15], %17 {strides = array<i32>} : memref<1x1x256xf32, #tpu.memory_space<vmem>>, vector<1x1x256xf32>,
    } else {
    }
    %c0 = arith.constant 0 : index
    %c0_2 = arith.constant 0 : index
    %c0_3 = arith.constant 0 : index
    %5 = vector.load %arg3[%c0, %c0_2, %c0_3] : memref<1x1x256xf32, #tpu.memory_space<vmem>>, vector<1x1x256xf32>
    %6 = vector.shape_cast %5 : vector<1x1x256xf32> to vector<1x256xf32>
    %c0_4 = arith.constant 0 : index
    %c0_5 = arith.constant 0 : index
    %c0_6 = arith.constant 0 : index
    %7 = vector.load %arg4[%c0_4, %c0_5, %c0_6] : memref<1x1x256xf32, #tpu.memory_space<vmem>>, vector<1x1x256xf32>
    %8 = vector.shape_cast %7 : vector<1x1x256xf32> to vector<1x256xf32>
    %9 = arith.subf %6, %8 : vector<1x256xf32>
    %c0_7 = arith.constant 0 : index
    %c0_8 = arith.constant 0 : index
    %c0_9 = arith.constant 0 : index
    %10 = vector.load %arg5[%c0_7, %c0_8, %c0_9] : memref<1x1x256xf32, #tpu.memory_space<vmem>>, vector<1x1x256xf32>
    %11 = vector.shape_cast %10 : vector<1x1x256xf32> to vector<1x256xf32>
    %12 = arith.mulf %9, %9 : vector<1x256xf32>
    %13 = arith.addf %11, %12 : vector<1x256xf32>
    %c0_10 = arith.constant 0 : index
    %c0_11 = arith.constant 0 : index
    %c0_12 = arith.constant 0 : index
    %14 = vector.load %arg5[%c0_10, %c0_11, %c0_12] : memref<1x1x256xf32, #tpu.memory_space<vmem>>, vector<1x1x256xf32>
    %15 = vector.shape_cast %14 : vector<1x1x256xf32> to vector<1x256xf32>
    %16 = vector.shape_cast %13 : vector<1x256xf32> to vector<1x1x256xf32>
    tpu.vector_store %arg5[%c0_10, %c0_11, %c0_12], %16 {strides = array<i32>} : memref<1x1x256xf32, #tpu.memory_space<vmem>>, vector<1x1x256xf32>,
    return
  }
  func.func @transform_0(%arg0: i32, %arg1: i32, %arg2: i32) -> (i32, i32, i32) {
    %c4_i32 = arith.constant 4 : i32
    %0 = arith.muli %arg1, %c4_i32 : i32
    %1 = arith.addi %0, %arg0 : i32
    %c0_i32 = arith.constant 0 : i32
    %c0_i32_0 = arith.constant 0 : i32
    return %1, %arg2, %c0_i32 : i32, i32, i32
  }
  func.func @transform_1(%arg0: i32, %arg1: i32, %arg2: i32) -> (i32, i32, i32) {
    %c4_i32 = arith.constant 4 : i32
    %0 = arith.muli %arg1, %c4_i32 : i32
    %1 = arith.addi %0, %arg0 : i32
    %c0_i32 = arith.constant 0 : i32
    %c0_i32_0 = arith.constant 0 : i32
    return %1, %arg2, %c0_i32 : i32, i32, i32
  }
  func.func @transform_2(%arg0: i32, %arg1: i32, %arg2: i32) -> (i32, i32, i32) {
    %c0_i32 = arith.constant 0 : i32
    %c0_i32_0 = arith.constant 0 : i32
    %c0_i32_1 = arith.constant 0 : i32
    return %arg0, %c0_i32, %c0_i32_0 : i32, i32, i32
  }
}

</mosaic_0001>

<llo_original>
// kernel: tpu_custom_call.1
$region0: #{tpu_custom_call.1}
  #allocation0 [shape = 'u32[]', space=smem, size = 0x4, offset = 0x4, fixed_abs, tag = 'smem constant byte address 0x4 - core index']
  #allocation1 [shape = 'u32[144,128]{1,0:T(1,128)}', space=vmem, size = 0x12000, scoped, tag = 'internal scratch']
  %s0 = inlined_call_operand.hbm [shape: f32[8,1,256], index: 0, kind: input, shape index: {}]
  %s1 = inlined_call_operand.hbm [shape: f32[8,1,256], index: 1, kind: input, shape index: {}]
  %s2 = inlined_call_operand.hbm [shape: f32[2,1,256], index: 2, kind: output, shape index: {}]
  %s3 = sld [smem:[#allocation0]]
  $region53: #{tpu_custom_call.1} parent=0
    _
  %s5 = ssub.s32 1, %s3
  %s6 = scalar_select 0, %s5, %s3
  $region1: #{tpu_custom_call.1} parent=0
    #allocation2 [shape = 'u8[2048]{0}', space=vmem, size = 0x800, scoped, tag = 'input window, operand 0']
    #allocation3 [shape = 's32[2]{0}', space=sflag, size = 0x8, scoped, tag = 'scoped memory for tpu_custom_call.1']
    #allocation4 [shape = 's32[2]{0}', space=sflag, size = 0x8, scoped, tag = 'scoped memory for tpu_custom_call.1']
    #allocation5 [shape = 'u8[2048]{0}', space=vmem, size = 0x800, scoped, tag = 'input window, operand 1']
    #allocation6 [shape = 's32[2]{0}', space=sflag, size = 0x8, scoped, tag = 'scoped memory for tpu_custom_call.1']
    #allocation7 [shape = 'u8[2048]{0}', space=vmem, size = 0x800, scoped, tag = 'output window, operand 0']
    %7 = vsyncpa [#allocation3], 0
    %s8 = scalar_lea.sflag [#allocation3], 1
    %9 = vsyncpa %s8, 0
    %10 = vsyncpa [#allocation6], 0
    %s11 = scalar_lea.sflag [#allocation6], 1
    %12 = vsyncpa %s11, 0
    %13 = vsyncpa [#allocation4], 0
    %s14 = scalar_lea.sflag [#allocation4], 1
    %15 = vsyncpa %s14, 0
    loop: start=0, step=1, limit=6
    $region2: #{tpu_custom_call.1} parent=1 // loop_pre_header
      _
    $region3: #{tpu_custom_call.1} parent=1 // loop_header
      %s17 = sphi 0, %s21
      %p18 = scmp.ge.s32.totalorder %s17, 6
      %s24 = sphi 0, %s43
      %s25 = sphi 0, %s39
      %s26 = sphi 0, %s35
      %s27 = sphi 0, %s24
      %s28 = sphi 0, %s25
      %s29 = sphi 0, %s26
      %s30 = sphi 0, %s27
      %s31 = sphi 0, %s28
      %s32 = sphi 0, %s29
      %s52 = sphi 0, %s54
      %s55 = sphi 0, %s52
      %s56 = sphi 0, %s55
      %s72 = sphi 0, %s56
      %s84 = sphi 0, %s86
      %s87 = sphi 0, %s84
      %s88 = sphi 0, %s87
      %s104 = sphi 0, %s88
      %s110 = sphi 0, %s112
      %s113 = sphi 0, %s110
      %s114 = sphi 0, %s113
      %s130 = sphi 0, %s114
    $region4: #{tpu_custom_call.1} parent=1 // loop_header_branch
      %20 = sbr.rel (%p18) target = $region8
    $region5: #{tpu_custom_call.1} parent=1 // loop_body
      %s22 = ssub.s32 %s17, 1
      %s23 = ssub.s32 %s17, 2
      %s33 = sadd.s32 1, %s26
      %p34 = scmp.ge.s32.totalorder %s33, 1
      %s35 = scalar_select %p34, 0, %s33
      %s36 = sadd.s32 1, %s25
      %s37 = scalar_select %p34, %s36, %s25
      %p38 = scmp.ge.s32.totalorder %s37, 2
      %s39 = scalar_select %p38, 0, %s37
      %s40 = sadd.s32 1, %s24
      %s41 = scalar_select %p38, %s40, %s24
      %p42 = scmp.ge.s32.totalorder %s41, 2
      %s43 = scalar_select %p42, 0, %s41
      %s44 = smul.u32 %s25, 4
      %s45 = sadd.s32 %s44, %s24
      %s46 = smul.u32 %s39, 4
      %s47 = sadd.s32 %s46, %s43
      %s48 = ssub.s32 %s45, %s47
      %s49 = ssub.s32 %s26, %s35
      %s50 = sor.u32 %s48, %s49
      %p51 = scmp.eq.s32.totalorder %s50, 0
      %s53 = sadd.s32 %s52, 1
      %s54 = scalar_select %p51, %s52, %s53
      %p57 = pneg %p51
      %p58 = scmp.eq.s32.totalorder %s17, 3
      %p59 = por %p57, %p58
      %p60 = scmp.ne.s32.totalorder %s52, %s55
      %p61 = scmp.eq.s32.totalorder %s17, 0
      %p62 = por %p60, %p61
      %p63 = scmp.ne.s32.totalorder %s52, %s55
      %p64 = scmp.eq.s32.totalorder %s22, 3
      %p65 = por %p63, %p64
      %p66 = scmp.ne.s32.totalorder %s55, %s56
      %p67 = scmp.eq.s32.totalorder %s22, 0
      %p68 = por %p66, %p67
      %p69 = scmp.ne.s32.totalorder %s55, %s56
      %p70 = scmp.eq.s32.totalorder %s23, 3
      %p71 = por %p69, %p70
      %p73 = scmp.ne.s32.totalorder %s56, %s72
      %p74 = scmp.eq.s32.totalorder %s23, 0
      %p75 = por %p73, %p74
      %s76 = smul.u32 %s25, 4
      %s77 = sadd.s32 %s76, %s24
      %s78 = smul.u32 %s39, 4
      %s79 = sadd.s32 %s78, %s43
      %s80 = ssub.s32 %s77, %s79
      %s81 = ssub.s32 %s26, %s35
      %s82 = sor.u32 %s80, %s81
      %p83 = scmp.eq.s32.totalorder %s82, 0
      %s85 = sadd.s32 %s84, 1
      %s86 = scalar_select %p83, %s84, %s85
      %p89 = pneg %p83
      %p90 = scmp.eq.s32.totalorder %s17, 3
      %p91 = por %p89, %p90
      %p92 = scmp.ne.s32.totalorder %s84, %s87
      %p93 = scmp.eq.s32.totalorder %s17, 0
      %p94 = por %p92, %p93
      %p95 = scmp.ne.s32.totalorder %s84, %s87
      %p96 = scmp.eq.s32.totalorder %s22, 3
      %p97 = por %p95, %p96
      %p98 = scmp.ne.s32.totalorder %s87, %s88
      %p99 = scmp.eq.s32.totalorder %s22, 0
      %p100 = por %p98, %p99
      %p101 = scmp.ne.s32.totalorder %s87, %s88
      %p102 = scmp.eq.s32.totalorder %s23, 3
      %p103 = por %p101, %p102
      %p105 = scmp.ne.s32.totalorder %s88, %s104
      %p106 = scmp.eq.s32.totalorder %s23, 0
      %p107 = por %p105, %p106
      %s108 = ssub.s32 %s24, %s43
      %p109 = scmp.eq.s32.totalorder %s108, 0
      %s111 = sadd.s32 %s110, 1
      %s112 = scalar_select %p109, %s110, %s111
      %p115 = pneg %p109
      %p116 = scmp.eq.s32.totalorder %s17, 3
      %p117 = por %p115, %p116
      %p118 = scmp.ne.s32.totalorder %s110, %s113
      %p119 = scmp.eq.s32.totalorder %s17, 0
      %p120 = por %p118, %p119
      %p121 = scmp.ne.s32.totalorder %s110, %s113
      %p122 = scmp.eq.s32.totalorder %s22, 3
      %p123 = por %p121, %p122
      %p124 = scmp.ne.s32.totalorder %s113, %s114
      %p125 = scmp.eq.s32.totalorder %s22, 0
      %p126 = por %p124, %p125
      %p127 = scmp.ne.s32.totalorder %s113, %s114
      %p128 = scmp.eq.s32.totalorder %s23, 3
      %p129 = por %p127, %p128
      %p131 = scmp.ne.s32.totalorder %s114, %s130
      %p132 = scmp.eq.s32.totalorder %s23, 0
      %p133 = por %p131, %p132
      %p134 = scmp.le.s32.totalorder 1, %s17
      %p135 = scmp.lt.s32.totalorder %s17, 5
      %p136 = pnand %p134, %p135
      %p137 = pneg %p136
      // Predicated region
      $region9: #{tpu_custom_call.1} parent=5 // pred_check
        _
      $region10: #{tpu_custom_call.1} parent=5 // pred_check_branch
        %139 = sbr.rel (%p136) target = $region12
      $region11: #{tpu_custom_call.1} parent=5 // pred_region
        %s140 = ssub.s32 %s17, 1
      $region12: #{tpu_custom_call.1} parent=5 // pred_fallthru
        _
      %p141 = scmp.lt.s32.totalorder %s17, 4
      // Predicated region
      $region13: #{tpu_custom_call.1} parent=5 // pred_check
        %p142 = pneg %p141
      $region14: #{tpu_custom_call.1} parent=5 // pred_check_branch
        %144 = sbr.rel (%p142) target = $region16
      $region15: #{tpu_custom_call.1} parent=5 // pred_region
        // Predicated region
        $region17: #{tpu_custom_call.1} parent=15 // pred_check
          %p145 = pneg %p62
        $region18: #{tpu_custom_call.1} parent=15 // pred_check_branch
          %147 = sbr.rel (%p145) target = $region20
        $region19: #{tpu_custom_call.1} parent=15 // pred_region
          %s148 = sand.u32 %s52, 1
          %s149 = scalar_lea.sflag [#allocation3], %s148
          %s150 = sand.u32 %s52, 1
          %s151 = smul.addr %s150, 2
          %s152 = scalar_lea.vmem [#allocation2], %s151
          %s153 = smul.u32 %s25, 4
          %s154 = sadd.s32 %s153, %s24
          %s156 = ssub.s32 32, 32
          %157 = vsyncadd %s149, %s156
          %s158 = smul.addr %s26, 2
          %s159 = smul.addr %s154, 2
          %s160 = sadd.s32 %s158, %s159
          %s161 = smul.addr %s160, 16
          %s162 = scalar_lea.hbm %s0, %s161
          %s164 = sshll.u32 %s152, 4
          %s165 = int_to_ptr.vmem [resolvable:$true] %s164
          %167 = dma.hbm_to_vmem [thread:$0]  %s162, 32, %s165, %s149
        $region20: #{tpu_custom_call.1} parent=15 // pred_fallthru
          _
        // Predicated region
        $region21: #{tpu_custom_call.1} parent=15 // pred_check
          %p168 = pneg %p94
        $region22: #{tpu_custom_call.1} parent=15 // pred_check_branch
          %170 = sbr.rel (%p168) target = $region24
        $region23: #{tpu_custom_call.1} parent=15 // pred_region
          %s171 = sand.u32 %s84, 1
          %s172 = scalar_lea.sflag [#allocation6], %s171
          %s173 = sand.u32 %s84, 1
          %s174 = smul.addr %s173, 2
          %s175 = scalar_lea.vmem [#allocation5], %s174
          %s176 = smul.u32 %s25, 4
          %s177 = sadd.s32 %s176, %s24
          %s179 = ssub.s32 32, 32
          %180 = vsyncadd %s172, %s179
          %s181 = smul.addr %s26, 2
          %s182 = smul.addr %s177, 2
          %s183 = sadd.s32 %s181, %s182
          %s184 = smul.addr %s183, 16
          %s185 = scalar_lea.hbm %s1, %s184
          %s187 = sshll.u32 %s175, 4
          %s188 = int_to_ptr.vmem [resolvable:$true] %s187
          %190 = dma.hbm_to_vmem [thread:$0]  %s185, 32, %s188, %s172
        $region24: #{tpu_custom_call.1} parent=15 // pred_fallthru
          _
      $region16: #{tpu_custom_call.1} parent=5 // pred_fallthru
        _
      %p191 = scmp.le.s32.totalorder 1, %s17
      %p192 = scmp.lt.s32.totalorder %s17, 5
      %p193 = pnand %p191, %p192
      %p194 = pneg %p193
      // Predicated region
      $region25: #{tpu_custom_call.1} parent=5 // pred_check
        _
      $region26: #{tpu_custom_call.1} parent=5 // pred_check_branch
        %196 = sbr.rel (%p193) target = $region28
      $region27: #{tpu_custom_call.1} parent=5 // pred_region
        %s197 = ssub.s32 %s17, 1
        %s198 = sand.u32 %s55, 1
        %s199 = scalar_lea.sflag [#allocation3], %s198
        %s200 = sand.u32 %s55, 1
        %s201 = smul.addr %s200, 2
        %s202 = scalar_lea.vmem [#allocation2], %s201
        // Predicated region
        $region29: #{tpu_custom_call.1} parent=27 // pred_check
          %p203 = pneg %p68
        $region30: #{tpu_custom_call.1} parent=27 // pred_check_branch
          %205 = sbr.rel (%p203) target = $region32
        $region31: #{tpu_custom_call.1} parent=27 // pred_region
          %206 = dma.done %s199, 32
        $region32: #{tpu_custom_call.1} parent=27 // pred_fallthru
          _
        %s207 = sand.u32 %s87, 1
        %s208 = scalar_lea.sflag [#allocation6], %s207
        %s209 = sand.u32 %s87, 1
        %s210 = smul.addr %s209, 2
        %s211 = scalar_lea.vmem [#allocation5], %s210
        // Predicated region
        $region33: #{tpu_custom_call.1} parent=27 // pred_check
          %p212 = pneg %p100
        $region34: #{tpu_custom_call.1} parent=27 // pred_check_branch
          %214 = sbr.rel (%p212) target = $region36
        $region35: #{tpu_custom_call.1} parent=27 // pred_region
          %215 = dma.done %s208, 32
        $region36: #{tpu_custom_call.1} parent=27 // pred_fallthru
          _
        %s216 = sand.u32 %s55, 1
        %s217 = scalar_lea.sflag [#allocation3], %s216
        %s218 = sand.u32 %s55, 1
        %s219 = smul.addr %s218, 2
        %s220 = scalar_lea.vmem [#allocation2], %s219
        %p221 = pneg %p68
        %p222 = pneg %p65
        %s223 = sand.u32 %s87, 1
        %s224 = scalar_lea.sflag [#allocation6], %s223
        %s225 = sand.u32 %s87, 1
        %s226 = smul.addr %s225, 2
        %s227 = scalar_lea.vmem [#allocation5], %s226
        %p228 = pneg %p100
        %p229 = pneg %p97
        %p230 = pneg %p126
        %p231 = pneg %p123
        %s232 = sand.u32 %s113, 1
        %s233 = scalar_lea.sflag [#allocation4], %s232
        %s234 = sand.u32 %s113, 1
        %s235 = smul.addr %s234, 2
        %s236 = scalar_lea.vmem [#allocation7], %s235
        %s237 = smul.u32 %s28, 4
        %s238 = sadd.s32 %s237, %s27
        %s239 = smul.u32 %s28, 4
        %s240 = sadd.s32 %s239, %s27
        %p241 = scmp.eq.s32.totalorder %s28, 0
        %p242 = scmp.eq.s32.totalorder %s29, 0
        %p243 = pnand %p241, %p242
        %p244 = pneg %p243
        // Predicated region
        $region37: #{tpu_custom_call.1} parent=27 // pred_check
          _
        $region38: #{tpu_custom_call.1} parent=27 // pred_check_branch
          %246 = sbr.rel (%p243) target = $region40
        $region39: #{tpu_custom_call.1} parent=27 // pred_region
          %v247 = vlaneseq
          %vm248 = vcmp.ge.s32.totalorder %v247, 0
          %vm249 = vcmp.lt.s32.totalorder %v247, 256
          %vm250 = vmand %vm248, %vm249
          %251 = vst.msk [vmem:[%s236] sm:$0x3] %vm250, 0.0
        $region40: #{tpu_custom_call.1} parent=27 // pred_fallthru
          _
        %v252 = vld [vmem:[%s202] sm:$0x3]
        %v253 = vld [vmem:[%s211] sm:$0x3]
        %v254 = vsub.f32 %v252, %v253
        %v255 = vld [vmem:[%s236] sm:$0x3]
        %v256 = vmul.f32 %v254, %v254
        %v257 = vadd.f32 %v255, %v256
        %v258 = vlaneseq
        %vm259 = vcmp.ge.s32.totalorder %v258, 0
        %vm260 = vcmp.lt.s32.totalorder %v258, 256
        %vm261 = vmand %vm259, %vm260
        %262 = vst.msk [vmem:[%s236] sm:$0x3] %vm261, %v257
        %s263 = sand.u32 %s113, 1
        %s264 = scalar_lea.sflag [#allocation4], %s263
        %s265 = sand.u32 %s113, 1
        %s266 = smul.addr %s265, 2
        %s267 = scalar_lea.vmem [#allocation7], %s266
        // Predicated region
        $region41: #{tpu_custom_call.1} parent=27 // pred_check
          %p268 = pneg %p123
        $region42: #{tpu_custom_call.1} parent=27 // pred_check_branch
          %270 = sbr.rel (%p268) target = $region44
        $region43: #{tpu_custom_call.1} parent=27 // pred_region
          %s272 = ssub.s32 32, 32
          %273 = vsyncadd %s264, %s272
          %s274 = smul.addr %s27, 2
          %s275 = smul.addr %s274, 16
          %s276 = scalar_lea.hbm %s2, %s275
          %s278 = sshll.u32 %s267, 4
          %s279 = int_to_ptr.vmem [resolvable:$true] %s278
          %281 = dma.vmem_to_hbm [thread:$0]  %s279, 32, %s276, %s264
        $region44: #{tpu_custom_call.1} parent=27 // pred_fallthru
          _
      $region28: #{tpu_custom_call.1} parent=5 // pred_fallthru
        _
      %p282 = scmp.le.s32.totalorder 2, %s17
      // Predicated region
      $region45: #{tpu_custom_call.1} parent=5 // pred_check
        %p283 = pneg %p282
      $region46: #{tpu_custom_call.1} parent=5 // pred_check_branch
        %285 = sbr.rel (%p283) target = $region48
      $region47: #{tpu_custom_call.1} parent=5 // pred_region
        %s286 = ssub.s32 %s17, 2
        // Predicated region
        $region49: #{tpu_custom_call.1} parent=47 // pred_check
          %p287 = pneg %p129
        $region50: #{tpu_custom_call.1} parent=47 // pred_check_branch
          %289 = sbr.rel (%p287) target = $region52
        $region51: #{tpu_custom_call.1} parent=47 // pred_region
          %s290 = sand.u32 %s114, 1
          %s291 = scalar_lea.sflag [#allocation4], %s290
          %s292 = sand.u32 %s114, 1
          %s293 = smul.addr %s292, 2
          %s294 = scalar_lea.vmem [#allocation7], %s293
          %295 = dma.done %s291, 32
        $region52: #{tpu_custom_call.1} parent=47 // pred_fallthru
          _
      $region48: #{tpu_custom_call.1} parent=5 // pred_fallthru
        _
    $region6: #{tpu_custom_call.1} parent=1 // loop_footer
      %s21 = sadd.s32 1, %s17
    $region7: #{tpu_custom_call.1} parent=1 // loop_footer_branch
      %16 = sbr.rel target = $region3
    $region8: #{tpu_custom_call.1} parent=1 // loop_exit
      _
    %296 = vsyncpa [#allocation3], 1
    %s297 = scalar_lea.sflag [#allocation3], 1
    %298 = vsyncpa %s297, 1
    %299 = vsyncpa [#allocation6], 1
    %s300 = scalar_lea.sflag [#allocation6], 1
    %301 = vsyncpa %s300, 1
    %302 = vsyncpa [#allocation4], 1
    %s303 = scalar_lea.sflag [#allocation4], 1
    %304 = vsyncpa %s303, 1

</llo_original>
